<compile_context>
chip_gen: v7x
topology: tpu7x:2x2x1
jax: 0.10.0
libtpu: 0.0.40
codegen_flags: <defaults>
</compile_context>

<pallas_src>
import functools

import jax
import jax.numpy as jnp
from jax.experimental import pallas as pl
from jax.experimental.pallas import tpu as pltpu


def _vq_kernel(z_ref, e_ref, em2_ref, esq_ref, zq_ref, sse_ref, *,
               n_valid, need_mask):
    # z_ref  : (C, TN)     lane-dense tile of inputs (columns = flattened pixels)
    # e_ref  : (K, C)      full codebook (for the gather)
    # em2_ref: (K, C)      -2 * codebook (for the distance matmul)
    # esq_ref: (K, 1)      precomputed ||e_k||^2
    # zq_ref : (C, TN)     quantized output tile
    # sse_ref: (1, 8, 128) per-tile sum of squared error (scalar broadcast)
    z = z_ref[...]                                   # (C, TN) f32
    e = e_ref[...]                                   # (K, C)  f32
    K = e.shape[0]
    TN = z.shape[1]

    # Distance score (||z||^2 dropped, argmin-invariant):
    #   d = ||e||^2 - 2 e.z  ==  esq + (-2e) @ z      -> MXU contraction over C.
    d = esq_ref[...] + jnp.dot(em2_ref[...], z,
                               preferred_element_type=jnp.float32)   # (K, TN)

    # First-index argmin over the codebook axis (matches torch.argmin ties on
    # the same expanded-form distances).  iota is kept (K,1) and broadcast.
    k_iota = jax.lax.broadcasted_iota(jnp.int32, (K, 1), 0)
    d_min = jnp.min(d, axis=0, keepdims=True)                         # (1, TN)
    idx = jnp.min(jnp.where(d == d_min, k_iota, K), axis=0, keepdims=True)
    onehot = (k_iota == idx).astype(jnp.float32)                      # (K, TN)

    # Gather codebook rows via a K-deep MXU contraction:
    #   zq[c, n] = sum_k e[k, c] * onehot[k, n]
    zq = jax.lax.dot_general(e, onehot, (((0,), (0,)), ((), ())),
                             preferred_element_type=jnp.float32)      # (C, TN)
    zq_ref[...] = zq.astype(zq_ref.dtype)

    # Per-tile SSE partial: on this distance form, per-column ||z - e_k*||^2
    # == d_min + ||z||^2, so only a (1, TN) row needs masking/reducing.
    zsq = jnp.sum(z * z, axis=0, keepdims=True)                       # (1, TN)
    sse_col = d_min + zsq                                             # (1, TN)
    if need_mask:
        col = (pl.program_id(0) * TN
               + jax.lax.broadcasted_iota(jnp.int32, (1, TN), 1))
        sse_col = jnp.where(col < n_valid, sse_col, 0.0)
    sse_ref[...] = jnp.zeros(sse_ref.shape, jnp.float32) + jnp.sum(sse_col)


def _vmem_capacity_bytes():
    try:
        return int(pltpu.get_tpu_info().vmem_capacity_bytes)
    except Exception:
        return 64 << 20          # conservative fallback (v7x per-TC VMEM)


def _round_up(x, m):
    return -(-x // m) * m


def _auto_tile_n(N, K, C, vmem_cap):
    # Budget ~40% of VMEM for the per-tile working set; estimate bytes per
    # lane-column: ~4 live (K,·) f32 intermediates + double-buffered z/zq tiles.
    budget = max(8 << 20, int(0.40 * vmem_cap))
    per_col = 16 * K + 16 * C + 64
    tile = (budget // per_col) // 128 * 128
    tile = int(max(128, min(tile, 4096)))
    n_up = _round_up(N, 128)
    tile = min(tile, n_up)
    # Prefer >= 2 grid steps when there is enough work so the "parallel" grid
    # axis can shard across both TensorCores on v7x (free on v5e/v6e).
    if N > 256 and tile >= n_up:
        tile = max(128, _round_up(n_up // 2, 128))
    return tile


def vector_quantize(z_nchw, embedding, beta=1.0, tile_n=None):
    """Forward pass of VectorQuantizer.

    z_nchw:    (B, C, H, W) float32
    embedding: (K, C) float32 codebook
    Returns (z_q in NCHW, scalar loss) matching the PyTorch forward values.
    """
    B, C, H, W = z_nchw.shape
    K, Cd = embedding.shape
    assert Cd == C

    vmem_cap = _vmem_capacity_bytes()
    N = B * H * W
    if tile_n is None:
        tile_n = _auto_tile_n(N, K, C, vmem_cap)
    assert tile_n % 128 == 0, "tile_n must be a multiple of 128 (lane width)"

    # NCHW -> (C, N) lane-dense layout; column n = ((b*H + h)*W + w), same
    # flattening order as the torch 'b h w c -> (b h w) c' rearrange.
    z_cn = jnp.transpose(z_nchw, (1, 0, 2, 3)).reshape(C, N).astype(jnp.float32)

    num_tiles = pl.cdiv(N, tile_n)
    n_pad = num_tiles * tile_n
    if n_pad != N:
        z_cn = jnp.pad(z_cn, ((0, 0), (0, n_pad - N)))

    e = embedding.astype(jnp.float32)
    e_m2 = -2.0 * e                                            # hoisted -2 fold
    e_sq = jnp.sum(e * e, axis=1, keepdims=True)               # (K, 1), hoisted

    kernel = functools.partial(_vq_kernel, n_valid=N, need_mask=(n_pad != N))

    # VMEM budget: (K, tile_n) intermediates + double-buffered I/O + headroom,
    # capped generation-aware at ~50% of physical VMEM.
    interm_bytes = 4 * K * tile_n * 4 + 4 * C * tile_n * 4
    io_bytes = 2 * (2 * C * tile_n * 4) + 2 * (2 * K * C + K) * 4 + 2 * 8 * 128 * 4
    cap = int(0.5 * vmem_cap)
    vmem_limit_bytes = int(min(max(2 * (interm_bytes + io_bytes), 8 << 20), cap))

    zq_cn, sse_part = pl.pallas_call(
        kernel,
        out_shape=(
            jax.ShapeDtypeStruct((C, n_pad), jnp.float32),
            jax.ShapeDtypeStruct((num_tiles, 8, 128), jnp.float32),
        ),
        grid_spec=pltpu.PrefetchScalarGridSpec(
            num_scalar_prefetch=0,
            grid=(num_tiles,),
            in_specs=[
                pl.BlockSpec((C, tile_n), lambda i: (0, i)),   # z tile (lane-dense)
                pl.BlockSpec((K, C), lambda i: (0, 0)),        # codebook (gather)
                pl.BlockSpec((K, C), lambda i: (0, 0)),        # -2 * codebook
                pl.BlockSpec((K, 1), lambda i: (0, 0)),        # ||e||^2
            ],
            out_specs=[
                pl.BlockSpec((C, tile_n), lambda i: (0, i)),     # zq tile
                pl.BlockSpec((1, 8, 128), lambda i: (i, 0, 0)),  # per-tile SSE
            ],
        ),
        compiler_params=pltpu.CompilerParams(
            dimension_semantics=("parallel",),   # no cross-grid state -> megacore OK
            vmem_limit_bytes=vmem_limit_bytes,
        ),
    )(z_cn, e, e_m2, e_sq)

    sse = jnp.sum(sse_part[:, 0, 0])
    mse = sse / jnp.float32(N * C)
    # Forward value of: beta*mean((zq.detach()-z)^2) + mean((zq-z.detach())^2)
    loss = beta * mse + mse

    # Straight-through output value: z + (zq - z).detach() == zq (forward value).
    zq_nchw = jnp.transpose(zq_cn[:, :N].reshape(C, B, H, W), (1, 0, 2, 3))
    return zq_nchw, loss


def _reference(z_nchw, embedding, beta=1.0):
    B, C, H, W = z_nchw.shape
    z = jnp.transpose(z_nchw, (0, 2, 3, 1)).reshape(-1, C)
    d = (jnp.sum(z**2, axis=1, keepdims=True)
         + jnp.sum(embedding**2, axis=1)[None, :]
         - 2.0 * z @ embedding.T)
    idx = jnp.argmin(d, axis=1)
    zq = embedding[idx]
    mse = jnp.mean((zq - z) ** 2)
    loss = beta * mse + mse
    zq = jnp.transpose(zq.reshape(B, H, W, C), (0, 3, 1, 2))
    return zq, loss


def _check(z, embedding, beta=1.0, tile_n=None):
    zq, loss = vector_quantize(z, embedding, beta=beta, tile_n=tile_n)
    zq = jax.block_until_ready(zq)
    loss = jax.block_until_ready(loss)
    zq_ref, loss_ref = _reference(z, embedding, beta=beta)
    assert zq.shape == z.shape
    assert jnp.allclose(zq, zq_ref, atol=1e-5), "z_q mismatch vs reference"
    assert jnp.allclose(loss, loss_ref, atol=1e-5), "loss mismatch vs reference"


if __name__ == "__main__":
    key = jax.random.PRNGKey(0)
    k_z, k_e, k_z2, k_e2 = jax.random.split(key, 4)

    # Test A: shapes consistent with the module (n_embed=64, embed_dim=C=4),
    # auto-sized tile (>= 2 grid steps for megacore).
    B, C, H, W = 2, 4, 16, 16
    n_embed = 64
    z = jax.random.normal(k_z, (B, C, H, W), dtype=jnp.float32)
    # nn.Embedding weight init: uniform(-1/n_embed, 1/n_embed), shape (n_embed, C)
    embedding = jax.random.uniform(
        k_e, (n_embed, C), dtype=jnp.float32,
        minval=-1.0 / n_embed, maxval=1.0 / n_embed)
    _check(z, embedding, beta=1.0)                 # auto tile

    # Test B: same data with a small explicit tile -> multi-tile grid +
    # per-tile SSE reduction path.
    _check(z, embedding, beta=1.0, tile_n=128)

    # Test C: N not a multiple of the tile -> padding + in-kernel mask path.
    B2, C2, H2, W2 = 1, 4, 10, 12
    n_embed2 = 32
    z2 = jax.random.normal(k_z2, (B2, C2, H2, W2), dtype=jnp.float32)
    embedding2 = jax.random.uniform(
        k_e2, (n_embed2, C2), dtype=jnp.float32,
        minval=-1.0 / n_embed2, maxval=1.0 / n_embed2)
    _check(z2, embedding2, beta=1.0)

    print("KERNEL_OK")
</pallas_src>

<mosaic_0001>
module attributes {stable_mosaic.version = 11 : i64} {
  func.func @_vq_kernel(%arg0: i32, %arg1: memref<4x256xf32, #tpu.memory_space<vmem>>, %arg2: memref<64x4xf32, #tpu.memory_space<vmem>>, %arg3: memref<64x4xf32, #tpu.memory_space<vmem>>, %arg4: memref<64x1xf32, #tpu.memory_space<vmem>>, %arg5: memref<4x256xf32, #tpu.memory_space<vmem>>, %arg6: memref<1x8x128xf32, #tpu.memory_space<vmem>>) attributes {dimension_semantics = [#tpu.dimension_semantics<parallel>], iteration_bounds = array<i64: 2>, scalar_prefetch = 0 : i64, scratch_operands = 0 : i64, tpu.core_type = #tpu.core_type<tc>, window_params = [{transform_indices = @transform_0, window_bounds = array<i64: 4, 256>}, {pipeline_mode = #tpu.pipeline_mode<synchronous>, transform_indices = @transform_1, window_bounds = array<i64: 64, 4>}, {pipeline_mode = #tpu.pipeline_mode<synchronous>, transform_indices = @transform_2, window_bounds = array<i64: 64, 4>}, {pipeline_mode = #tpu.pipeline_mode<synchronous>, transform_indices = @transform_3, window_bounds = array<i64: 64, 1>}, {transform_indices = @transform_4, window_bounds = array<i64: 4, 256>}, {transform_indices = @transform_5, window_bounds = array<i64: 1, 8, 128>}]} {
    %c0 = arith.constant 0 : index
    %c0_0 = arith.constant 0 : index
    %0 = vector.load %arg1[%c0, %c0_0] : memref<4x256xf32, #tpu.memory_space<vmem>>, vector<4x256xf32>
    %c0_1 = arith.constant 0 : index
    %c0_2 = arith.constant 0 : index
    %1 = vector.load %arg2[%c0_1, %c0_2] : memref<64x4xf32, #tpu.memory_space<vmem>>, vector<64x4xf32>
    %c0_3 = arith.constant 0 : index
    %c0_4 = arith.constant 0 : index
    %2 = vector.load %arg4[%c0_3, %c0_4] : memref<64x1xf32, #tpu.memory_space<vmem>>, vector<64x1xf32>
    %c0_5 = arith.constant 0 : index
    %c0_6 = arith.constant 0 : index
    %3 = vector.load %arg3[%c0_5, %c0_6] : memref<64x4xf32, #tpu.memory_space<vmem>>, vector<64x4xf32>
    %cst = arith.constant dense<0.000000e+00> : vector<64x256xf32>
    %4 = tpu.matmul %3, %0, %cst {dimension_numbers = #tpu.dot_dimension_numbers<[1], [0], [0], [1], [0, 0, 1, 1], [], []>} : vector<64x4xf32>, vector<4x256xf32>, vector<64x256xf32> -> vector<64x256xf32>
    %5 = vector.broadcast %2 : vector<64x1xf32> to vector<64x256xf32>
    %6 = arith.addf %5, %4 : vector<64x256xf32>
    %7 = tpu.iota {dimensions = array<i32: 0>} : vector<64x1xi32>
    %cst_7 = arith.constant dense<0x7F800000> : vector<256xf32>
    %8 = vector.multi_reduction <minimumf>, %6, %cst_7 [0] : vector<64x256xf32> to vector<256xf32>
    %9 = vector.shape_cast %8 : vector<256xf32> to vector<1x256xf32>
    %10 = vector.broadcast %9 : vector<1x256xf32> to vector<64x256xf32>
    %11 = arith.cmpf oeq, %6, %10 : vector<64x256xf32>
    %c64_i32 = arith.constant 64 : i32
    %12 = vector.shape_cast %7 : vector<64x1xi32> to vector<64x1xi32>
    %13 = vector.broadcast %12 : vector<64x1xi32> to vector<64x256xi32>
    %14 = vector.broadcast %c64_i32 : i32 to vector<64x256xi32>
    %15 = arith.select %11, %13, %14 : vector<64x256xi1>, vector<64x256xi32>
    %cst_8 = arith.constant dense<2147483647> : vector<256xi32>
    %16 = vector.multi_reduction <minsi>, %15, %cst_8 [0] : vector<64x256xi32> to vector<256xi32>
    %17 = vector.shape_cast %16 : vector<256xi32> to vector<1x256xi32>
    %18 = vector.broadcast %7 : vector<64x1xi32> to vector<64x256xi32>
    %19 = vector.broadcast %17 : vector<1x256xi32> to vector<64x256xi32>
    %20 = arith.cmpi eq, %18, %19 : vector<64x256xi32>
    %21 = arith.extui %20 : vector<64x256xi1> to vector<64x256xi32>
    %22 = arith.sitofp %21 : vector<64x256xi32> to vector<64x256xf32>
    %cst_9 = arith.constant dense<0.000000e+00> : vector<4x256xf32>
    %23 = tpu.matmul %1, %22, %cst_9 {dimension_numbers = #tpu.dot_dimension_numbers<[0], [0], [1], [1], [0, 1, 1, 1], [], []>} : vector<64x4xf32>, vector<64x256xf32>, vector<4x256xf32> -> vector<4x256xf32>
    %c0_10 = arith.constant 0 : index
    %c0_11 = arith.constant 0 : index
    %24 = vector.load %arg5[%c0_10, %c0_11] : memref<4x256xf32, #tpu.memory_space<vmem>>, vector<4x256xf32>
    tpu.vector_store %arg5[%c0_10, %c0_11], %23 {strides = array<i32>} : memref<4x256xf32, #tpu.memory_space<vmem>>, vector<4x256xf32>,
    %25 = arith.mulf %0, %0 : vector<4x256xf32>
    %cst_12 = arith.constant dense<0.000000e+00> : vector<256xf32>
    %26 = vector.multi_reduction <add>, %25, %cst_12 [0] : vector<4x256xf32> to vector<256xf32>
    %27 = vector.shape_cast %26 : vector<256xf32> to vector<1x256xf32>
    %28 = arith.addf %9, %27 : vector<1x256xf32>
    %cst_13 = arith.constant 0.000000e+00 : f32
    %29 = vector.broadcast %cst_13 : f32 to vector<1x8x128xf32>
    %30 = vector.shape_cast %28 : vector<1x256xf32> to vector<1x1x256xf32>
    %cst_14 = arith.constant dense<0.000000e+00> : vector<1xf32>
    %31 = vector.multi_reduction <add>, %30, %cst_14 [1, 2] : vector<1x1x256xf32> to vector<1xf32>
    %32 = vector.shape_cast %31 : vector<1xf32> to vector<1x1x1xf32>
    %33 = vector.extract %32[0, 0, 0] : f32 from vector<1x1x1xf32>
    %34 = vector.broadcast %33 : f32 to vector<1x8x128xf32>
    %35 = arith.addf %29, %34 : vector<1x8x128xf32>
    %c0_15 = arith.constant 0 : index
    %c0_16 = arith.constant 0 : index
    %c0_17 = arith.constant 0 : index
    %36 = vector.load %arg6[%c0_15, %c0_16, %c0_17] : memref<1x8x128xf32, #tpu.memory_space<vmem>>, vector<1x8x128xf32>
    tpu.vector_store %arg6[%c0_15, %c0_16, %c0_17], %35 {strides = array<i32>} : memref<1x8x128xf32, #tpu.memory_space<vmem>>, vector<1x8x128xf32>,
    return
  }
  func.func @transform_0(%arg0: i32) -> (i32, i32) {
    %c0_i32 = arith.constant 0 : i32
    %c0_i32_0 = arith.constant 0 : i32
    return %c0_i32, %arg0 : i32, i32
  }
  func.func @transform_1(%arg0: i32) -> (i32, i32) {
    %c0_i32 = arith.constant 0 : i32
    %c0_i32_0 = arith.constant 0 : i32
    %c0_i32_1 = arith.constant 0 : i32
    return %c0_i32, %c0_i32_0 : i32, i32
  }
  func.func @transform_2(%arg0: i32) -> (i32, i32) {
    %c0_i32 = arith.constant 0 : i32
    %c0_i32_0 = arith.constant 0 : i32
    %c0_i32_1 = arith.constant 0 : i32
    return %c0_i32, %c0_i32_0 : i32, i32
  }
  func.func @transform_3(%arg0: i32) -> (i32, i32) {
    %c0_i32 = arith.constant 0 : i32
    %c0_i32_0 = arith.constant 0 : i32
    %c0_i32_1 = arith.constant 0 : i32
    return %c0_i32, %c0_i32_0 : i32, i32
  }
  func.func @transform_4(%arg0: i32) -> (i32, i32) {
    %c0_i32 = arith.constant 0 : i32
    %c0_i32_0 = arith.constant 0 : i32
    return %c0_i32, %arg0 : i32, i32
  }
  func.func @transform_5(%arg0: i32) -> (i32, i32, i32) {
    %c0_i32 = arith.constant 0 : i32
    %c0_i32_0 = arith.constant 0 : i32
    %c0_i32_1 = arith.constant 0 : i32
    return %arg0, %c0_i32, %c0_i32_0 : i32, i32, i32
  }
}

</mosaic_0001>

<llo_original>
// kernel: tpu_custom_call.1
$region0: #{tpu_custom_call.1}
  #allocation0 [shape = 'u32[]', space=smem, size = 0x4, offset = 0x4, fixed_abs, tag = 'smem constant byte address 0x4 - core index']
  #allocation1 [shape = 'u32[144,128]{1,0:T(1,128)}', space=vmem, size = 0x12000, scoped, tag = 'internal scratch']
  %s0 = inlined_call_operand.vmem [shape: f32[4,512], index: 0, kind: input, shape index: {}]
  %s1 = inlined_call_operand.vmem [shape: f32[64,4], index: 1, kind: input, shape index: {}]
  %s2 = inlined_call_operand.vmem [shape: f32[64,4], index: 2, kind: input, shape index: {}]
  %s3 = inlined_call_operand.vmem [shape: f32[64,1], index: 3, kind: input, shape index: {}]
  %s4 = inlined_call_operand.hbm [shape: f32[4,512], index: 4, kind: output, shape index: {0}]
  %s5 = inlined_call_operand.hbm [shape: f32[2,8,128], index: 5, kind: output, shape index: {1}]
  %6 = xla_tuple %s4, %s5
  %s7 = sld [smem:[#allocation0]]
  $region57: #{tpu_custom_call.1} parent=0
    _
  %s9 = ssub.s32 1, %s7
  %s10 = scalar_select 0, %s9, %s7
  $region1: #{tpu_custom_call.1} parent=0
    #allocation2 [shape = 'u8[8192]{0}', space=vmem, size = 0x2000, scoped, tag = 'output window, operand 0']
    #allocation3 [shape = 's32[2]{0}', space=sflag, size = 0x8, scoped, tag = 'scoped memory for tpu_custom_call.1']
    #allocation4 [shape = 'u8[8192]{0}', space=vmem, size = 0x2000, scoped, tag = 'output window, operand 1']
    #allocation5 [shape = 's32[2]{0}', space=sflag, size = 0x8, scoped, tag = 'scoped memory for tpu_custom_call.1']
    %11 = vsyncpa [#allocation3], 0
    %s12 = scalar_lea.sflag [#allocation3], 1
    %13 = vsyncpa %s12, 0
    %14 = vsyncpa [#allocation5], 0
    %s15 = scalar_lea.sflag [#allocation5], 1
    %16 = vsyncpa %s15, 0
    loop: start=0, step=1, limit=4
    $region2: #{tpu_custom_call.1} parent=1 // loop_pre_header
      _
    $region3: #{tpu_custom_call.1} parent=1 // loop_header
      %s18 = sphi 0, %s22
      %p19 = scmp.ge.s32.totalorder %s18, 4
      %s28 = sphi 0, %s30
      %s31 = sphi 0, %s28
      %s32 = sphi 0, %s31
      %s48 = sphi 0, %s32
      %s52 = sphi 0, %s52
      %s54 = sphi 0, %s52
      %s55 = sphi 0, %s54
      %s69 = sphi 0, %s55
      %s73 = sphi 0, %s73
      %s75 = sphi 0, %s73
      %s76 = sphi 0, %s75
      %s90 = sphi 0, %s76
      %s94 = sphi 0, %s94
      %s96 = sphi 0, %s94
      %s97 = sphi 0, %s96
      %s111 = sphi 0, %s97
      %s117 = sphi 0, %s119
      %s120 = sphi 0, %s117
      %s121 = sphi 0, %s120
      %s137 = sphi 0, %s121
      %s143 = sphi 0, %s145
      %s146 = sphi 0, %s143
      %s147 = sphi 0, %s146
      %s163 = sphi 0, %s147
    $region4: #{tpu_custom_call.1} parent=1 // loop_header_branch
      %21 = sbr.rel (%p19) target = $region8
    $region5: #{tpu_custom_call.1} parent=1 // loop_body
      %s23 = ssub.s32 %s18, 1
      %s24 = ssub.s32 %s18, 2
      %s25 = sadd.s32 %s18, 1
      %s26 = ssub.s32 %s18, %s25
      %p27 = scmp.eq.s32.totalorder %s26, 0
      %s29 = sadd.s32 %s28, 1
      %s30 = scalar_select %p27, %s28, %s29
      %p33 = pneg %p27
      %p34 = scmp.eq.s32.totalorder %s18, 1
      %p35 = por %p33, %p34
      %p36 = scmp.ne.s32.totalorder %s28, %s31
      %p37 = scmp.eq.s32.totalorder %s18, 0
      %p38 = por %p36, %p37
      %p39 = scmp.ne.s32.totalorder %s28, %s31
      %p40 = scmp.eq.s32.totalorder %s23, 1
      %p41 = por %p39, %p40
      %p42 = scmp.ne.s32.totalorder %s31, %s32
      %p43 = scmp.eq.s32.totalorder %s23, 0
      %p44 = por %p42, %p43
      %p45 = scmp.ne.s32.totalorder %s31, %s32
      %p46 = scmp.eq.s32.totalorder %s24, 1
      %p47 = por %p45, %p46
      %p49 = scmp.ne.s32.totalorder %s32, %s48
      %p50 = scmp.eq.s32.totalorder %s24, 0
      %p51 = por %p49, %p50
      %s53 = sadd.s32 %s52, 1
      %p56 = scmp.eq.s32.totalorder %s18, 1
      %p57 = scmp.ne.s32.totalorder %s52, %s54
      %p58 = scmp.eq.s32.totalorder %s18, 0
      %p59 = por %p57, %p58
      %p60 = scmp.ne.s32.totalorder %s52, %s54
      %p61 = scmp.eq.s32.totalorder %s23, 1
      %p62 = por %p60, %p61
      %p63 = scmp.ne.s32.totalorder %s54, %s55
      %p64 = scmp.eq.s32.totalorder %s23, 0
      %p65 = por %p63, %p64
      %p66 = scmp.ne.s32.totalorder %s54, %s55
      %p67 = scmp.eq.s32.totalorder %s24, 1
      %p68 = por %p66, %p67
      %p70 = scmp.ne.s32.totalorder %s55, %s69
      %p71 = scmp.eq.s32.totalorder %s24, 0
      %p72 = por %p70, %p71
      %s74 = sadd.s32 %s73, 1
      %p77 = scmp.eq.s32.totalorder %s18, 1
      %p78 = scmp.ne.s32.totalorder %s73, %s75
      %p79 = scmp.eq.s32.totalorder %s18, 0
      %p80 = por %p78, %p79
      %p81 = scmp.ne.s32.totalorder %s73, %s75
      %p82 = scmp.eq.s32.totalorder %s23, 1
      %p83 = por %p81, %p82
      %p84 = scmp.ne.s32.totalorder %s75, %s76
      %p85 = scmp.eq.s32.totalorder %s23, 0
      %p86 = por %p84, %p85
      %p87 = scmp.ne.s32.totalorder %s75, %s76
      %p88 = scmp.eq.s32.totalorder %s24, 1
      %p89 = por %p87, %p88
      %p91 = scmp.ne.s32.totalorder %s76, %s90
      %p92 = scmp.eq.s32.totalorder %s24, 0
      %p93 = por %p91, %p92
      %s95 = sadd.s32 %s94, 1
      %p98 = scmp.eq.s32.totalorder %s18, 1
      %p99 = scmp.ne.s32.totalorder %s94, %s96
      %p100 = scmp.eq.s32.totalorder %s18, 0
      %p101 = por %p99, %p100
      %p102 = scmp.ne.s32.totalorder %s94, %s96
      %p103 = scmp.eq.s32.totalorder %s23, 1
      %p104 = por %p102, %p103
      %p105 = scmp.ne.s32.totalorder %s96, %s97
      %p106 = scmp.eq.s32.totalorder %s23, 0
      %p107 = por %p105, %p106
      %p108 = scmp.ne.s32.totalorder %s96, %s97
      %p109 = scmp.eq.s32.totalorder %s24, 1
      %p110 = por %p108, %p109
      %p112 = scmp.ne.s32.totalorder %s97, %s111
      %p113 = scmp.eq.s32.totalorder %s24, 0
      %p114 = por %p112, %p113
      %s115 = ssub.s32 %s18, %s25
      %p116 = scmp.eq.s32.totalorder %s115, 0
      %s118 = sadd.s32 %s117, 1
      %s119 = scalar_select %p116, %s117, %s118
      %p122 = pneg %p116
      %p123 = scmp.eq.s32.totalorder %s18, 1
      %p124 = por %p122, %p123
      %p125 = scmp.ne.s32.totalorder %s117, %s120
      %p126 = scmp.eq.s32.totalorder %s18, 0
      %p127 = por %p125, %p126
      %p128 = scmp.ne.s32.totalorder %s117, %s120
      %p129 = scmp.eq.s32.totalorder %s23, 1
      %p130 = por %p128, %p129
      %p131 = scmp.ne.s32.totalorder %s120, %s121
      %p132 = scmp.eq.s32.totalorder %s23, 0
      %p133 = por %p131, %p132
      %p134 = scmp.ne.s32.totalorder %s120, %s121
      %p135 = scmp.eq.s32.totalorder %s24, 1
      %p136 = por %p134, %p135
      %p138 = scmp.ne.s32.totalorder %s121, %s137
      %p139 = scmp.eq.s32.totalorder %s24, 0
      %p140 = por %p138, %p139
      %s141 = ssub.s32 %s18, %s25
      %p142 = scmp.eq.s32.totalorder %s141, 0
      %s144 = sadd.s32 %s143, 1
      %s145 = scalar_select %p142, %s143, %s144
      %p148 = pneg %p142
      %p149 = scmp.eq.s32.totalorder %s18, 1
      %p150 = por %p148, %p149
      %p151 = scmp.ne.s32.totalorder %s143, %s146
      %p152 = scmp.eq.s32.totalorder %s18, 0
      %p153 = por %p151, %p152
      %p154 = scmp.ne.s32.totalorder %s143, %s146
      %p155 = scmp.eq.s32.totalorder %s23, 1
      %p156 = por %p154, %p155
      %p157 = scmp.ne.s32.totalorder %s146, %s147
      %p158 = scmp.eq.s32.totalorder %s23, 0
      %p159 = por %p157, %p158
      %p160 = scmp.ne.s32.totalorder %s146, %s147
      %p161 = scmp.eq.s32.totalorder %s24, 1
      %p162 = por %p160, %p161
      %p164 = scmp.ne.s32.totalorder %s147, %s163
      %p165 = scmp.eq.s32.totalorder %s24, 0
      %p166 = por %p164, %p165
      %p167 = scmp.le.s32.totalorder 1, %s18
      %p168 = scmp.lt.s32.totalorder %s18, 3
      %p169 = pnand %p167, %p168
      %p170 = pneg %p169
      // Predicated region
      $region9: #{tpu_custom_call.1} parent=5 // pred_check
        _
      $region10: #{tpu_custom_call.1} parent=5 // pred_check_branch
        %172 = sbr.rel (%p169) target = $region12
      $region11: #{tpu_custom_call.1} parent=5 // pred_region
        %s173 = ssub.s32 %s18, 1
        // Predicated region
        $region13: #{tpu_custom_call.1} parent=11 // pred_check
          %p174 = pneg %p65
        $region14: #{tpu_custom_call.1} parent=11 // pred_check_branch
          %176 = sbr.rel (%p174) target = $region16
        $region15: #{tpu_custom_call.1} parent=11 // pred_region
          _
        $region16: #{tpu_custom_call.1} parent=11 // pred_fallthru
          _
        // Predicated region
        $region17: #{tpu_custom_call.1} parent=11 // pred_check
          %p177 = pneg %p86
        $region18: #{tpu_custom_call.1} parent=11 // pred_check_branch
          %179 = sbr.rel (%p177) target = $region20
        $region19: #{tpu_custom_call.1} parent=11 // pred_region
          _
        $region20: #{tpu_custom_call.1} parent=11 // pred_fallthru
          _
        // Predicated region
        $region21: #{tpu_custom_call.1} parent=11 // pred_check
          %p180 = pneg %p107
        $region22: #{tpu_custom_call.1} parent=11 // pred_check_branch
          %182 = sbr.rel (%p180) target = $region24
        $region23: #{tpu_custom_call.1} parent=11 // pred_region
          _
        $region24: #{tpu_custom_call.1} parent=11 // pred_fallthru
          _
      $region12: #{tpu_custom_call.1} parent=5 // pred_fallthru
        _
      %p183 = scmp.lt.s32.totalorder %s18, 2
      // Predicated region
      $region25: #{tpu_custom_call.1} parent=5 // pred_check
        %p184 = pneg %p183
      $region26: #{tpu_custom_call.1} parent=5 // pred_check_branch
        %186 = sbr.rel (%p184) target = $region28
      $region27: #{tpu_custom_call.1} parent=5 // pred_region
        // Predicated region
        $region29: #{tpu_custom_call.1} parent=27 // pred_check
          %p187 = pneg %p38
        $region30: #{tpu_custom_call.1} parent=27 // pred_check_branch
          %189 = sbr.rel (%p187) target = $region32
        $region31: #{tpu_custom_call.1} parent=27 // pred_region
          %s190 = smul.u32 2, %s18
          %p191 = scmp.lt.s32.totalorder %s190, 3
          %s192 = scalar_select %p191, %s190, 3
          %s193 = smul.addr %s192, 4
          %s194 = scalar_lea.vmem %s0, %s193
          %s195 = smul.u32 2, %s18
        $region32: #{tpu_custom_call.1} parent=27 // pred_fallthru
          _
      $region28: #{tpu_custom_call.1} parent=5 // pred_fallthru
        _
      %p196 = scmp.le.s32.totalorder 1, %s18
      %p197 = scmp.lt.s32.totalorder %s18, 3
      %p198 = pnand %p196, %p197
      %p199 = pneg %p198
      // Predicated region
      $region33: #{tpu_custom_call.1} parent=5 // pred_check
        _
      $region34: #{tpu_custom_call.1} parent=5 // pred_check_branch
        %201 = sbr.rel (%p198) target = $region36
      $region35: #{tpu_custom_call.1} parent=5 // pred_region
        %s202 = ssub.s32 %s18, 1
        %s203 = smul.u32 2, %s23
        %p204 = scmp.lt.s32.totalorder %s203, 3
        %s205 = scalar_select %p204, %s203, 3
        %s206 = smul.addr %s205, 4
        %s207 = scalar_lea.vmem %s0, %s206
        %p208 = pneg %p44
        %p209 = pneg %p41
        %p210 = pneg %p65
        %p211 = pneg %p62
        %p212 = pneg %p86
        %p213 = pneg %p83
        %p214 = pneg %p107
        %p215 = pneg %p104
        %p216 = pneg %p133
        %p217 = pneg %p130
        %s218 = sand.u32 %s120, 1
        %s219 = scalar_lea.sflag [#allocation3], %s218
        %s220 = sand.u32 %s120, 1
        %s221 = smul.addr %s220, 8
        %s222 = scalar_lea.vmem [#allocation2], %s221
        %p223 = pneg %p159
        %p224 = pneg %p156
        %s225 = sand.u32 %s146, 1
        %s226 = scalar_lea.sflag [#allocation5], %s225
        %s227 = sand.u32 %s146, 1
        %s228 = smul.addr %s227, 8
        %s229 = scalar_lea.vmem [#allocation4], %s228
        %s230 = smul.u32 2, %s23
        %p231 = scmp.lt.s32.totalorder %s230, 3
        %s232 = scalar_select %p231, %s230, 3
        %s233 = smul.addr %s232, 4
        %s234 = scalar_lea.vmem %s0, %s233
        %s235 = smul.u32 2, %s23
        %s236 = smul.u32 2, %s23
        %v237 = vld [vmem:[%s234] sm:$0xff]
        %v238 = vld [vmem:[%s1] sm:$0xff]
        %v239 = vld [vmem:[%s1 + $0x8] sm:$0xff]
        %v240 = vld [vmem:[%s1 + $0x10] sm:$0xff]
        %v241 = vld [vmem:[%s1 + $0x18] sm:$0xff]
        %v242 = vld [vmem:[%s1 + $0x20] sm:$0xff]
        %v243 = vld [vmem:[%s1 + $0x28] sm:$0xff]
        %v244 = vld [vmem:[%s1 + $0x30] sm:$0xff]
        %v245 = vld [vmem:[%s1 + $0x38] sm:$0xff]
        %v246 = vld [vmem:[%s3] sm:$0xff]
        %v247 = vld [vmem:[%s3 + $0x8] sm:$0xff]
        %v248 = vld [vmem:[%s3 + $0x10] sm:$0xff]
        %v249 = vld [vmem:[%s3 + $0x18] sm:$0xff]
        %v250 = vld [vmem:[%s3 + $0x20] sm:$0xff]
        %v251 = vld [vmem:[%s3 + $0x28] sm:$0xff]
        %v252 = vld [vmem:[%s3 + $0x30] sm:$0xff]
        %v253 = vld [vmem:[%s3 + $0x38] sm:$0xff]
        %v254 = vld [vmem:[%s2] sm:$0xff]
        %v255 = vld [vmem:[%s2 + $0x8] sm:$0xff]
        %v256 = vld [vmem:[%s2 + $0x10] sm:$0xff]
        %v257 = vld [vmem:[%s2 + $0x18] sm:$0xff]
        %v258 = vld [vmem:[%s2 + $0x20] sm:$0xff]
        %v259 = vld [vmem:[%s2 + $0x28] sm:$0xff]
        %v260 = vld [vmem:[%s2 + $0x30] sm:$0xff]
        %v261 = vld [vmem:[%s2 + $0x38] sm:$0xff]
        %v263 = vcombine.high %v237, %v237
        %vm264 = vcmask 31744
        %v266 = vsel %vm264, %v254, 0
        %v269 = vsel %vm264, %v255, 0
        %v272 = vsel %vm264, %v256, 0
        %v275 = vsel %vm264, %v257, 0
        %v278 = vsel %vm264, %v258, 0
        %v281 = vsel %vm264, %v259, 0
        %v284 = vsel %vm264, %v260, 0
        %v287 = vsel %vm264, %v261, 0
        %vm289 = vcmask 1043456
        %v290 = vsel %vm289, %v237, 0
        %v292 = vsel %vm289, %v263, 0
        %294 = vmatprep.subr.mxu0 %v292
        %295 = vmatpush1.msra.mxu0 %v290
        %296 = vmatprep.subr.mxu0 0.0
        %297 = vmatpush1.msra.mxu0 0.0
        %298 = vmatprep.subr.mxu0 0.0
        %299 = vmatpush1.msra.mxu0 0.0
        %300 = vmatprep.subr.mxu0 0.0
        %301 = vmatpush1.msra.mxu0 0.0
        %302 = vmatprep.subr.mxu0 0.0
        %303 = vmatpush1.msra.mxu0 0.0
        %304 = vmatprep.subr.mxu0 0.0
        %305 = vmatpush1.msra.mxu0 0.0
        %306 = vmatprep.subr.mxu0 0.0
        %307 = vmatpush1.msra.mxu0 0.0
        %308 = vmatprep.subr.mxu0 0.0
        %309 = vmatpush1.msra.mxu0 0.0
        %310 = vmatprep.subr.mxu0 0.0
        %311 = vmatpush1.msra.mxu0 0.0
        %312 = vmatprep.subr.mxu0 0.0
        %313 = vmatpush1.msra.mxu0 0.0
        %314 = vmatprep.subr.mxu0 0.0
        %315 = vmatpush1.msra.mxu0 0.0
        %316 = vmatprep.subr.mxu0 0.0
        %317 = vmatpush1.msra.mxu0 0.0
        %318 = vmatprep.subr.mxu0 0.0
        %319 = vmatpush1.msra.mxu0 0.0
        %320 = vmatprep.subr.mxu0 0.0
        %321 = vmatpush1.msra.mxu0 0.0
        %322 = vmatprep.subr.mxu0 0.0
        %323 = vmatpush1.msra.mxu0 0.0
        %324 = vmatprep.subr.mxu0 0.0
        %325 = vmatpush1.msra.mxu0 0.0
        %326 = vmatprep.subr.mxu0 0.0
        %327 = vmatpush1.msra.mxu0 0.0
        %328 = vmatprep.subr.mxu0 0.0
        %329 = vmatpush1.msra.mxu0 0.0
        %330 = vmatprep.subr.mxu0 0.0
        %331 = vmatpush1.msra.mxu0 0.0
        %332 = vmatprep.subr.mxu0 0.0
        %333 = vmatpush1.msra.mxu0 0.0
        %334 = vmatprep.subr.mxu0 0.0
        %335 = vmatpush1.msra.mxu0 0.0
        %336 = vmatprep.subr.mxu0 0.0
        %337 = vmatpush1.msra.mxu0 0.0
        %338 = vmatprep.subr.mxu0 0.0
        %339 = vmatpush1.msra.mxu0 0.0
        %340 = vmatprep.subr.mxu0 0.0
        %341 = vmatpush1.msra.mxu0 0.0
        %342 = vmatprep.subr.mxu0 0.0
        %343 = vmatpush1.msra.mxu0 0.0
        %344 = vmatprep.subr.mxu0 0.0
        %345 = vmatpush1.msra.mxu0 0.0
        %346 = vmatprep.subr.mxu0 0.0
        %347 = vmatpush1.msra.mxu0 0.0
        %348 = vmatprep.subr.mxu0 0.0
        %349 = vmatpush1.msra.mxu0 0.0
        %350 = vmatprep.subr.mxu0 0.0
        %351 = vmatpush1.msra.mxu0 0.0
        %352 = vmatprep.subr.mxu0 0.0
        %353 = vmatpush1.msra.mxu0 0.0
        %354 = vmatprep.subr.mxu0 0.0
        %355 = vmatpush1.msra.mxu0 0.0
        %356 = vmatprep.subr.mxu0 0.0
        %357 = vmatpush1.msra.mxu0 0.0
        %358 = vmatprep.mubr.f32.mxu0 0.0
        %359 = vmatmul.mubr.f32.gmra.mrb[0].mxu0 %v266
        %v360 = vpop.f32.mrb[0].mxu0
        %v361 = vadd.f32 0.0, %v360
        %v362 = vpop.f32.mrb[0].mxu0
        %v363 = vadd.f32 0.0, %v362
        %364 = vmatprep.mubr.f32.mxu0 0.0
        %365 = vmatmul.mubr.f32.gmra.mrb[0].mxu0 %v269
        %v366 = vpop.f32.mrb[0].mxu0
        %v367 = vadd.f32 0.0, %v366
        %v368 = vpop.f32.mrb[0].mxu0
        %v369 = vadd.f32 0.0, %v368
        %370 = vmatprep.mubr.f32.mxu0 0.0
        %371 = vmatmul.mubr.f32.gmra.mrb[0].mxu0 %v272
        %v372 = vpop.f32.mrb[0].mxu0
        %v373 = vadd.f32 0.0, %v372
        %v374 = vpop.f32.mrb[0].mxu0
        %v375 = vadd.f32 0.0, %v374
        %376 = vmatprep.mubr.f32.mxu0 0.0
        %377 = vmatmul.mubr.f32.gmra.mrb[0].mxu0 %v275
        %v378 = vpop.f32.mrb[0].mxu0
        %v379 = vadd.f32 0.0, %v378
        %v380 = vpop.f32.mrb[0].mxu0
        %v381 = vadd.f32 0.0, %v380
        %382 = vmatprep.mubr.f32.mxu0 0.0
        %383 = vmatmul.mubr.f32.gmra.mrb[0].mxu0 %v278
        %v384 = vpop.f32.mrb[0].mxu0
        %v385 = vadd.f32 0.0, %v384
        %v386 = vpop.f32.mrb[0].mxu0
        %v387 = vadd.f32 0.0, %v386
        %388 = vmatprep.mubr.f32.mxu0 0.0
        %389 = vmatmul.mubr.f32.gmra.mrb[0].mxu0 %v281
        %v390 = vpop.f32.mrb[0].mxu0
        %v391 = vadd.f32 0.0, %v390
        %v392 = vpop.f32.mrb[0].mxu0
        %v393 = vadd.f32 0.0, %v392
        %394 = vmatprep.mubr.f32.mxu0 0.0
        %395 = vmatmul.mubr.f32.gmra.mrb[0].mxu0 %v284
        %v396 = vpop.f32.mrb[0].mxu0
        %v397 = vadd.f32 0.0, %v396
        %v398 = vpop.f32.mrb[0].mxu0
        %v399 = vadd.f32 0.0, %v398
        %400 = vmatprep.mubr.f32.mxu0 0.0
        %401 = vmatmul.mubr.f32.gmra.mrb[0].mxu0 %v287
        %v402 = vpop.f32.mrb[0].mxu0
        %v403 = vadd.f32 0.0, %v402
        %v404 = vpop.f32.mrb[0].mxu0
        %v405 = vadd.f32 0.0, %v404
        %406 = vdwg.mxu0
        %408 = vset.pattern.permute.xlu0 0
        %409 = vperm.xlu0 %408, %v246
        %v410 = vpop.permute.xlu0 %409
        %413 = vset.pattern.permute.xlu0 0
        %414 = vperm.xlu0 %413, %v247
        %v415 = vpop.permute.xlu0 %414
        %418 = vset.pattern.permute.xlu0 0
        %419 = vperm.xlu0 %418, %v248
        %v420 = vpop.permute.xlu0 %419
        %423 = vset.pattern.permute.xlu0 0
        %424 = vperm.xlu0 %423, %v249
        %v425 = vpop.permute.xlu0 %424
        %428 = vset.pattern.permute.xlu0 0
        %429 = vperm.xlu0 %428, %v250
        %v430 = vpop.permute.xlu0 %429
        %433 = vset.pattern.permute.xlu0 0
        %434 = vperm.xlu0 %433, %v251
        %v435 = vpop.permute.xlu0 %434
        %438 = vset.pattern.permute.xlu0 0
        %439 = vperm.xlu0 %438, %v252
        %v440 = vpop.permute.xlu0 %439
        %443 = vset.pattern.permute.xlu0 0
        %444 = vperm.xlu0 %443, %v253
        %v445 = vpop.permute.xlu0 %444
        %v447 = vadd.f32 %v410, %v361
        %v448 = vadd.f32 %v410, %v363
        %v449 = vadd.f32 %v415, %v367
        %v450 = vadd.f32 %v415, %v369
        %v451 = vadd.f32 %v420, %v373
        %v452 = vadd.f32 %v420, %v375
        %v453 = vadd.f32 %v425, %v379
        %v454 = vadd.f32 %v425, %v381
        %v455 = vadd.f32 %v430, %v385
        %v456 = vadd.f32 %v430, %v387
        %v457 = vadd.f32 %v435, %v391
        %v458 = vadd.f32 %v435, %v393
        %v459 = vadd.f32 %v440, %v397
        %v460 = vadd.f32 %v440, %v399
        %v461 = vadd.f32 %v445, %v403
        %v462 = vadd.f32 %v445, %v405
        %v463 = vlaneseq
        %v464 = vshrl.u32 %v463, 7
        %v465 = vadd.s32 %v464, 8
        %v466 = vadd.s32 %v464, 16
        %v467 = vadd.s32 %v464, 24
        %v468 = vadd.s32 %v464, 32
        %v469 = vadd.s32 %v464, 40
        %v470 = vadd.s32 %v464, 48
        %v471 = vadd.s32 %v464, 56
        %v472 = vmin.f32 %v447, %v451
        %v473 = vmin.f32 %v449, %v453
        %v474 = vmin.f32 %v472, %v455
        %v475 = vmin.f32 %v473, %v457
        %v476 = vmin.f32 %v474, %v459
        %v477 = vmin.f32 %v475, %v461
        %v478 = vmin.f32 %v476, %v477
        %v479 = vrot.slane %v478, 4
        %v480 = vmin.f32 %v478, %v479
        %v481 = vrot.slane %v480, 2
        %v482 = vmin.f32 %v480, %v481
        %v483 = vrot.slane %v482, 1
        %v484 = vmin.f32 %v482, %v483
        %v485 = vmin.f32 %v448, %v452
        %v486 = vmin.f32 %v450, %v454
        %v487 = vmin.f32 %v485, %v456
        %v488 = vmin.f32 %v486, %v458
        %v489 = vmin.f32 %v487, %v460
        %v490 = vmin.f32 %v488, %v462
        %v491 = vmin.f32 %v489, %v490
        %v492 = vrot.slane %v491, 4
        %v493 = vmin.f32 %v491, %v492
        %v494 = vrot.slane %v493, 2
        %v495 = vmin.f32 %v493, %v494
        %v496 = vrot.slane %v495, 1
        %v497 = vmin.f32 %v495, %v496
        %vm498 = vcmp.eq.f32.partialorder %v447, %v484
        %vm499 = vcmp.eq.f32.partialorder %v448, %v497
        %vm500 = vcmp.eq.f32.partialorder %v449, %v484
        %vm501 = vcmp.eq.f32.partialorder %v450, %v497
        %vm502 = vcmp.eq.f32.partialorder %v451, %v484
        %vm503 = vcmp.eq.f32.partialorder %v452, %v497
        %vm504 = vcmp.eq.f32.partialorder %v453, %v484
        %vm505 = vcmp.eq.f32.partialorder %v454, %v497
        %vm506 = vcmp.eq.f32.partialorder %v455, %v484
        %vm507 = vcmp.eq.f32.partialorder %v456, %v497
        %vm508 = vcmp.eq.f32.partialorder %v457, %v484
        %vm509 = vcmp.eq.f32.partialorder %v458, %v497
        %vm510 = vcmp.eq.f32.partialorder %v459, %v484
        %vm511 = vcmp.eq.f32.partialorder %v460, %v497
        %vm512 = vcmp.eq.f32.partialorder %v461, %v484
        %vm513 = vcmp.eq.f32.partialorder %v462, %v497
        %v514 = vsel %vm498, %v464, 64
        %v515 = vsel %vm499, %v464, 64
        %v516 = vsel %vm500, %v465, 64
        %v517 = vsel %vm501, %v465, 64
        %v518 = vsel %vm502, %v466, 64
        %v519 = vsel %vm503, %v466, 64
        %v520 = vsel %vm504, %v467, 64
        %v521 = vsel %vm505, %v467, 64
        %v522 = vsel %vm506, %v468, 64
        %v523 = vsel %vm507, %v468, 64
        %v524 = vsel %vm508, %v469, 64
        %v525 = vsel %vm509, %v469, 64
        %v526 = vsel %vm510, %v470, 64
        %v527 = vsel %vm511, %v470, 64
        %v528 = vsel %vm512, %v471, 64
        %v529 = vsel %vm513, %v471, 64
        %vm530 = vcmp.lt.s32.totalorder %v514, %v518
        %v531 = vsel %vm530, %v514, %v518
        %vm532 = vcmp.lt.s32.totalorder %v516, %v520
        %v533 = vsel %vm532, %v516, %v520
        %vm534 = vcmp.lt.s32.totalorder %v531, %v522
        %v535 = vsel %vm534, %v531, %v522
        %vm536 = vcmp.lt.s32.totalorder %v533, %v524
        %v537 = vsel %vm536, %v533, %v524
        %vm538 = vcmp.lt.s32.totalorder %v535, %v526
        %v539 = vsel %vm538, %v535, %v526
        %vm540 = vcmp.lt.s32.totalorder %v537, %v528
        %v541 = vsel %vm540, %v537, %v528
        %vm542 = vcmp.lt.s32.totalorder %v539, %v541
        %v543 = vsel %vm542, %v539, %v541
        %v544 = vrot.slane %v543, 4
        %vm545 = vcmp.lt.s32.totalorder %v543, %v544
        %v546 = vsel %vm545, %v543, %v544
        %v547 = vrot.slane %v546, 2
        %vm548 = vcmp.lt.s32.totalorder %v546, %v547
        %v549 = vsel %vm548, %v546, %v547
        %v550 = vrot.slane %v549, 1
        %vm551 = vcmp.lt.s32.totalorder %v549, %v550
        %v552 = vsel %vm551, %v549, %v550
        %vm553 = vcmp.lt.s32.totalorder %v515, %v519
        %v554 = vsel %vm553, %v515, %v519
        %vm555 = vcmp.lt.s32.totalorder %v517, %v521
        %v556 = vsel %vm555, %v517, %v521
        %vm557 = vcmp.lt.s32.totalorder %v554, %v523
        %v558 = vsel %vm557, %v554, %v523
        %vm559 = vcmp.lt.s32.totalorder %v556, %v525
        %v560 = vsel %vm559, %v556, %v525
        %vm561 = vcmp.lt.s32.totalorder %v558, %v527
        %v562 = vsel %vm561, %v558, %v527
        %vm563 = vcmp.lt.s32.totalorder %v560, %v529
        %v564 = vsel %vm563, %v560, %v529
        %vm565 = vcmp.lt.s32.totalorder %v562, %v564
        %v566 = vsel %vm565, %v562, %v564
        %v567 = vrot.slane %v566, 4
        %vm568 = vcmp.lt.s32.totalorder %v566, %v567
        %v569 = vsel %vm568, %v566, %v567
        %v570 = vrot.slane %v569, 2
        %vm571 = vcmp.lt.s32.totalorder %v569, %v570
        %v572 = vsel %vm571, %v569, %v570
        %v573 = vrot.slane %v572, 1
        %vm574 = vcmp.lt.s32.totalorder %v572, %v573
        %v575 = vsel %vm574, %v572, %v573
        %vm576 = vcmp.eq.s32.totalorder %v464, %v552
        %vm577 = vcmp.eq.s32.totalorder %v464, %v575
        %vm578 = vcmp.eq.s32.totalorder %v465, %v552
        %vm579 = vcmp.eq.s32.totalorder %v465, %v575
        %vm580 = vcmp.eq.s32.totalorder %v466, %v552
        %vm581 = vcmp.eq.s32.totalorder %v466, %v575
        %vm582 = vcmp.eq.s32.totalorder %v467, %v552
        %vm583 = vcmp.eq.s32.totalorder %v467, %v575
        %vm584 = vcmp.eq.s32.totalorder %v468, %v552
        %vm585 = vcmp.eq.s32.totalorder %v468, %v575
        %vm586 = vcmp.eq.s32.totalorder %v469, %v552
        %vm587 = vcmp.eq.s32.totalorder %v469, %v575
        %vm588 = vcmp.eq.s32.totalorder %v470, %v552
        %vm589 = vcmp.eq.s32.totalorder %v470, %v575
        %vm590 = vcmp.eq.s32.totalorder %v471, %v552
        %vm591 = vcmp.eq.s32.totalorder %v471, %v575
        %v592 = vsel %vm576, 1, 0
        %v593 = vsel %vm577, 1, 0
        %v594 = vsel %vm578, 1, 0
        %v595 = vsel %vm579, 1, 0
        %v596 = vsel %vm580, 1, 0
        %v597 = vsel %vm581, 1, 0
        %v598 = vsel %vm582, 1, 0
        %v599 = vsel %vm583, 1, 0
        %v600 = vsel %vm584, 1, 0
        %v601 = vsel %vm585, 1, 0
        %v602 = vsel %vm586, 1, 0
        %v603 = vsel %vm587, 1, 0
        %v604 = vsel %vm588, 1, 0
        %v605 = vsel %vm589, 1, 0
        %v606 = vsel %vm590, 1, 0
        %v607 = vsel %vm591, 1, 0
        %v608 = vcvt.s32.f32 %v592
        %v609 = vcvt.s32.f32 %v593
        %v610 = vcvt.s32.f32 %v594
        %v611 = vcvt.s32.f32 %v595
        %v612 = vcvt.s32.f32 %v596
        %v613 = vcvt.s32.f32 %v597
        %v614 = vcvt.s32.f32 %v598
        %v615 = vcvt.s32.f32 %v599
        %v616 = vcvt.s32.f32 %v600
        %v617 = vcvt.s32.f32 %v601
        %v618 = vcvt.s32.f32 %v602
        %v619 = vcvt.s32.f32 %v603
        %v620 = vcvt.s32.f32 %v604
        %v621 = vcvt.s32.f32 %v605
        %v622 = vcvt.s32.f32 %v606
        %v623 = vcvt.s32.f32 %v607
        %624 = vxpose.xlu0.b32.start [1/16] %v238, 128
        %625 = vxpose.xlu0.b32.cont [2/16] %v239, 128
        %626 = vxpose.xlu0.b32.cont [3/16] %v240, 128
        %627 = vxpose.xlu0.b32.cont [4/16] %v241, 128
        %628 = vxpose.xlu0.b32.cont [5/16] %v242, 128
        %629 = vxpose.xlu0.b32.cont [6/16] %v243, 128
        %630 = vxpose.xlu0.b32.cont [7/16] %v244, 128
        %631 = vxpose.xlu0.b32.cont [8/16] %v245, 128
        %632 = vxpose.xlu0.b32.cont [9/16] 0.0, 128
        %633 = vxpose.xlu0.b32.cont [10/16] 0.0, 128
        %634 = vxpose.xlu0.b32.cont [11/16] 0.0, 128
        %635 = vxpose.xlu0.b32.cont [12/16] 0.0, 128
        %636 = vxpose.xlu0.b32.cont [13/16] 0.0, 128
        %637 = vxpose.xlu0.b32.cont [14/16] 0.0, 128
        %638 = vxpose.xlu0.b32.cont [15/16] 0.0, 128
        %639 = vxpose.xlu0.b32.end [16/16] 0.0, 128
        %v640 = vpop.trf.xlu0
        %v641 = vpop.trf.xlu0
        %v642 = vpop.trf.xlu0
        %v643 = vpop.trf.xlu0
        %v644 = vpop.trf.xlu0
        %v645 = vpop.trf.xlu0
        %v646 = vpop.trf.xlu0
        %v647 = vpop.trf.xlu0
        %v648 = vpop.trf.xlu0
        %v649 = vpop.trf.xlu0
        %v650 = vpop.trf.xlu0
        %v651 = vpop.trf.xlu0
        %v652 = vpop.trf.xlu0
        %v653 = vpop.trf.xlu0
        %v654 = vpop.trf.xlu0
        %v655 = vpop.trf.xlu0
        %vm656 = vcmask 523264
        %v658 = vsel %vm656, %v640, 0
        %660 = vmatprep.subr.mxu0 %v609
        %661 = vmatpush1.msra.mxu0 %v608
        %662 = vmatprep.subr.mxu0 %v611
        %663 = vmatpush1.msra.mxu0 %v610
        %664 = vmatprep.subr.mxu0 %v613
        %665 = vmatpush1.msra.mxu0 %v612
        %666 = vmatprep.subr.mxu0 %v615
        %667 = vmatpush1.msra.mxu0 %v614
        %668 = vmatprep.subr.mxu0 %v617
        %669 = vmatpush1.msra.mxu0 %v616
        %670 = vmatprep.subr.mxu0 %v619
        %671 = vmatpush1.msra.mxu0 %v618
        %672 = vmatprep.subr.mxu0 %v621
        %673 = vmatpush1.msra.mxu0 %v620
        %674 = vmatprep.subr.mxu0 %v623
        %675 = vmatpush1.msra.mxu0 %v622
        %676 = vmatprep.subr.mxu0 0.0
        %677 = vmatpush1.msra.mxu0 0.0
        %678 = vmatprep.subr.mxu0 0.0
        %679 = vmatpush1.msra.mxu0 0.0
        %680 = vmatprep.subr.mxu0 0.0
        %681 = vmatpush1.msra.mxu0 0.0
        %682 = vmatprep.subr.mxu0 0.0
        %683 = vmatpush1.msra.mxu0 0.0
        %684 = vmatprep.subr.mxu0 0.0
        %685 = vmatpush1.msra.mxu0 0.0
        %686 = vmatprep.subr.mxu0 0.0
        %687 = vmatpush1.msra.mxu0 0.0
        %688 = vmatprep.subr.mxu0 0.0
        %689 = vmatpush1.msra.mxu0 0.0
        %690 = vmatprep.subr.mxu0 0.0
        %691 = vmatpush1.msra.mxu0 0.0
        %692 = vmatprep.subr.mxu0 0.0
        %693 = vmatpush1.msra.mxu0 0.0
        %694 = vmatprep.subr.mxu0 0.0
        %695 = vmatpush1.msra.mxu0 0.0
        %696 = vmatprep.subr.mxu0 0.0
        %697 = vmatpush1.msra.mxu0 0.0
        %698 = vmatprep.subr.mxu0 0.0
        %699 = vmatpush1.msra.mxu0 0.0
        %700 = vmatprep.subr.mxu0 0.0
        %701 = vmatpush1.msra.mxu0 0.0
        %702 = vmatprep.subr.mxu0 0.0
        %703 = vmatpush1.msra.mxu0 0.0
        %704 = vmatprep.subr.mxu0 0.0
        %705 = vmatpush1.msra.mxu0 0.0
        %706 = vmatprep.subr.mxu0 0.0
        %707 = vmatpush1.msra.mxu0 0.0
        %708 = vmatprep.subr.mxu0 0.0
        %709 = vmatpush1.msra.mxu0 0.0
        %710 = vmatprep.subr.mxu0 0.0
        %711 = vmatpush1.msra.mxu0 0.0
        %712 = vmatprep.subr.mxu0 0.0
        %713 = vmatpush1.msra.mxu0 0.0
        %714 = vmatprep.subr.mxu0 0.0
        %715 = vmatpush1.msra.mxu0 0.0
        %716 = vmatprep.subr.mxu0 0.0
        %717 = vmatpush1.msra.mxu0 0.0
        %718 = vmatprep.subr.mxu0 0.0
        %719 = vmatpush1.msra.mxu0 0.0
        %720 = vmatprep.subr.mxu0 0.0
        %721 = vmatpush1.msra.mxu0 0.0
        %722 = vmatprep.subr.mxu0 0.0
        %723 = vmatpush1.msra.mxu0 0.0
        %724 = vmatprep.mubr.f32.mxu0 0.0
        %725 = vmatmul.mubr.f32.gmra.mrb[0].mxu0 %v658
        %v726 = vpop.f32.mrb[0].mxu0
        %v727 = vadd.f32 0.0, %v726
        %v728 = vpop.f32.mrb[0].mxu0
        %v729 = vadd.f32 0.0, %v728
        %730 = vdwg.mxu0
        %v733 = vcombine.low %v727, %v729
        %735 = vst [vmem:[%s222] sm:$0xff] %v733
        %v736 = vmul.f32 %v237, %v237
        %v738 = vcombine.high %v736, %v736
        %v740 = vsel %vm289, %v736, 0.0
        %v741 = vrot.slane %v740, 4
        %v742 = vadd.f32 %v740, %v741
        %v743 = vrot.slane %v742, 2
        %v744 = vadd.f32 %v742, %v743
        %v745 = vrot.slane %v744, 1
        %v746 = vadd.f32 %v744, %v745
        %v747 = vsel %vm289, %v738, 0.0
        %v748 = vrot.slane %v747, 4
        %v749 = vadd.f32 %v747, %v748
        %v750 = vrot.slane %v749, 2
        %v751 = vadd.f32 %v749, %v750
        %v752 = vrot.slane %v751, 1
        %v753 = vadd.f32 %v751, %v752
        %v754 = vadd.f32 %v484, %v746
        %v755 = vadd.f32 %v497, %v753
        %vm756 = vcmask 1040384
        %v757 = vsel %vm756, %v754, 0.0
        %v758 = vsel %vm756, %v755, 0.0
        %v759 = vadd.f32 %v757, %v758
        %760 = vadd.xlane.f32.xlu0 %v759
        %v761 = vpop.xlane.xlu0 %760
        %v762 = vrot.slane %v761, 4
        %v763 = vadd.f32 %v761, %v762
        %v764 = vrot.slane %v763, 2
        %v765 = vadd.f32 %v763, %v764
        %v766 = vrot.slane %v765, 1
        %v767 = vadd.f32 %v765, %v766
        %s768 = vtos %v767
        %v769 = vstv %s768
        %v770 = vadd.f32 %v769, 0.0
        %771 = vst [vmem:[%s229] sm:$0xff] %v770
        %s772 = sand.u32 %s120, 1
        %s773 = scalar_lea.sflag [#allocation3], %s772
        %s774 = sand.u32 %s120, 1
        %s775 = smul.addr %s774, 8
        %s776 = scalar_lea.vmem [#allocation2], %s775
        %s777 = sand.u32 %s146, 1
        %s778 = scalar_lea.sflag [#allocation5], %s777
        %s779 = sand.u32 %s146, 1
        %s780 = smul.addr %s779, 8
        %s781 = scalar_lea.vmem [#allocation4], %s780
        // Predicated region
        $region37: #{tpu_custom_call.1} parent=35 // pred_check
          %p782 = pneg %p130
        $region38: #{tpu_custom_call.1} parent=35 // pred_check_branch
          %784 = sbr.rel (%p782) target = $region40
        $region39: #{tpu_custom_call.1} parent=35 // pred_region
          %s785 = smul.u32 2, %s23
          %s787 = ssub.s32 128, 128
          %788 = vsyncadd %s773, %s787
          %s789 = smul.addr %s785, 64
          %s790 = scalar_lea.hbm %s4, %s789
          %s792 = sshll.u32 %s776, 4
          %s793 = int_to_ptr.vmem [resolvable:$true] %s792
          %795 = dma.vmem_to_hbm [thread:$0]  %s793, 128, %s790, %s773
        $region40: #{tpu_custom_call.1} parent=35 // pred_fallthru
          _
        // Predicated region
        $region41: #{tpu_custom_call.1} parent=35 // pred_check
          %p796 = pneg %p156
        $region42: #{tpu_custom_call.1} parent=35 // pred_check_branch
          %798 = sbr.rel (%p796) target = $region44
        $region43: #{tpu_custom_call.1} parent=35 // pred_region
          %s800 = ssub.s32 128, 128
          %801 = vsyncadd %s778, %s800
          %s802 = smul.addr %s23, 128
          %s803 = scalar_lea.hbm %s5, %s802
          %s805 = sshll.u32 %s781, 4
          %s806 = int_to_ptr.vmem [resolvable:$true] %s805
          %808 = dma.vmem_to_hbm [thread:$0]  %s806, 128, %s803, %s778
        $region44: #{tpu_custom_call.1} parent=35 // pred_fallthru
          _
      $region36: #{tpu_custom_call.1} parent=5 // pred_fallthru
        _
      %p809 = scmp.le.s32.totalorder 2, %s18
      // Predicated region
      $region45: #{tpu_custom_call.1} parent=5 // pred_check
        %p810 = pneg %p809
      $region46: #{tpu_custom_call.1} parent=5 // pred_check_branch
        %812 = sbr.rel (%p810) target = $region48
      $region47: #{tpu_custom_call.1} parent=5 // pred_region
        %s813 = ssub.s32 %s18, 2
        // Predicated region
        $region49: #{tpu_custom_call.1} parent=47 // pred_check
          %p814 = pneg %p136
        $region50: #{tpu_custom_call.1} parent=47 // pred_check_branch
          %816 = sbr.rel (%p814) target = $region52
        $region51: #{tpu_custom_call.1} parent=47 // pred_region
          %s817 = sand.u32 %s121, 1
          %s818 = scalar_lea.sflag [#allocation3], %s817
          %s819 = sand.u32 %s121, 1
          %s820 = smul.addr %s819, 8
          %s821 = scalar_lea.vmem [#allocation2], %s820
          %822 = dma.done %s818, 128
        $region52: #{tpu_custom_call.1} parent=47 // pred_fallthru
          _
        // Predicated region
        $region53: #{tpu_custom_call.1} parent=47 // pred_check
          %p823 = pneg %p162
        $region54: #{tpu_custom_call.1} parent=47 // pred_check_branch
          %825 = sbr.rel (%p823) target = $region56
        $region55: #{tpu_custom_call.1} parent=47 // pred_region
          %s826 = sand.u32 %s147, 1
          %s827 = scalar_lea.sflag [#allocation5], %s826
          %s828 = sand.u32 %s147, 1
          %s829 = smul.addr %s828, 8
          %s830 = scalar_lea.vmem [#allocation4], %s829
          %831 = dma.done %s827, 128
        $region56: #{tpu_custom_call.1} parent=47 // pred_fallthru
          _
      $region48: #{tpu_custom_call.1} parent=5 // pred_fallthru
        _
    $region6: #{tpu_custom_call.1} parent=1 // loop_footer
      %s22 = sadd.s32 1, %s18
    $region7: #{tpu_custom_call.1} parent=1 // loop_footer_branch
      %17 = sbr.rel target = $region3
    $region8: #{tpu_custom_call.1} parent=1 // loop_exit
      _
    %832 = vsyncpa [#allocation3], 1
    %s833 = scalar_lea.sflag [#allocation3], 1
    %834 = vsyncpa %s833, 1
    %835 = vsyncpa [#allocation5], 1
    %s836 = scalar_lea.sflag [#allocation5], 1
    %837 = vsyncpa %s836, 1

</llo_original>
